<compile_context>
chip_gen: v6e
topology: v6e:2x2x1
jax: 0.10.0
libtpu: 0.0.40
codegen_flags: <defaults>
</compile_context>

<pallas_src>
import math
from functools import partial

import jax
import jax.numpy as jnp
from jax.experimental import pallas as pl
from jax.experimental.pallas import tpu as pltpu


# ---------------------------------------------------------------------------
# Kernel: one (head-block, q-tile) step; whole key axis resident in VMEM.
# ---------------------------------------------------------------------------
def _attn_kernel(q_ref, k_ref, v_ref, o_ref, *, scale_sq, compute_dtype,
                 exp_dtype):
    """Block layouts:
         q_ref : (bb, C, Tq)   k_ref, v_ref : (bb, C, T)   o_ref : (bb, C, Tq)
    """
    # Fold both PyTorch scale factors (q*scale)·(k*scale) into q once.
    q = (q_ref[...].astype(jnp.float32) * scale_sq).astype(compute_dtype)
    k = k_ref[...].astype(compute_dtype)
    v = v_ref[...].astype(compute_dtype)

    # s[b, s, t] = sum_c k[b,c,s] * q[b,c,t]  -> (bb, T, Tq); f32 accum on MXU.
    s = jax.lax.dot_general(
        k, q, (((1,), (1,)), ((0,), (0,))), preferred_element_type=jnp.float32)

    # Plain softmax over the key axis: the whole key axis is in this block, so
    # no online-softmax (m/l carry + alpha rescale) is needed.
    m = jnp.max(s, axis=1, keepdims=True)                        # (bb, 1, Tq) f32
    p = jnp.exp((s - m).astype(exp_dtype))                       # bf16 exp on v6e/v7x
    l = jnp.sum(p.astype(jnp.float32), axis=1, keepdims=True)    # f32 row sums
    inv_l = pl.reciprocal(l, approx=True)                        # EUP, ~free slot

    # a[b, c, t] = sum_s v[b,c,s] * p[b,s,t]  -> (bb, C, Tq); f32 accumulation.
    a = jax.lax.dot_general(
        v, p.astype(compute_dtype), (((2,), (1,)), ((0,), (0,))),
        preferred_element_type=jnp.float32)
    o_ref[...] = (a * inv_l).astype(o_ref.dtype)


# ---------------------------------------------------------------------------
# Wrapper helpers
# ---------------------------------------------------------------------------
def _pick_tq(t, pref=256):
    """Largest multiple of 128 (<= pref) dividing t, else the full length."""
    if t % 128 != 0:
        return t
    tq = min(pref, t)
    while t % tq:
        tq -= 128
    return tq


def _sublane_multiple(dtype):
    return {4: 8, 2: 16, 1: 32}.get(jnp.dtype(dtype).itemsize, 8)


def _default_exp_dtype():
    # bf16 exp ~doubles EUP throughput on v6e/v7x; v5e/v4/older have no bf16
    # EUP, keep f32 there.
    try:
        kind = jax.devices()[0].device_kind.lower()
    except Exception:
        return jnp.bfloat16
    for tag in ("v5 lite", "v5e", "v5lite", "v4", "v3", "v2"):
        if tag in kind:
            return jnp.float32
    return jnp.bfloat16


# ---------------------------------------------------------------------------
# Wrapper
# ---------------------------------------------------------------------------
def qkv_attention_legacy(qkv, n_heads, *, tq=None, block_heads=None,
                         compute_dtype=jnp.bfloat16, exp_dtype=None,
                         vmem_budget_bytes=12 * 1024 * 1024):
    """Pallas TPU forward of QKVAttentionLegacy.

    qkv: (N, n_heads * 3 * C, T)  ->  (N, n_heads * C, T)
    """
    bs, width, length = qkv.shape
    assert width % (3 * n_heads) == 0
    ch = width // (3 * n_heads)
    B = bs * n_heads
    scale_sq = 1.0 / math.sqrt(ch)          # (1/ch**0.25)**2, both scales folded

    if exp_dtype is None:
        exp_dtype = _default_exp_dtype()

    in_dtype = qkv.dtype
    itemsize = jnp.dtype(in_dtype).itemsize

    tq = tq or _pick_tq(length)
    assert length % tq == 0
    n_q = length // tq

    # --- batch-head blocking: amortize per-grid-step overhead at small T -----
    if block_heads is None:
        per_head = (2 * length * tq * 4                 # s + p score blocks
                    + 2 * 2 * ch * length * itemsize    # double-buffered K, V
                    + 2 * 2 * ch * tq * itemsize)       # double-buffered Q, O
        max_bb = max(1, vmem_budget_bytes // per_head)
        block_heads = 1
        for bb_cand in (8, 4, 2):
            if (bb_cand <= max_bb and B % bb_cand == 0
                    and ((B // bb_cand) * n_q >= 2 or B * n_q <= 1)):
                block_heads = bb_cand
                break
    bb = block_heads
    assert B % bb == 0
    nb = B // bb

    x3 = qkv.reshape(B, 3 * ch, length)     # contiguous -> no-copy reshape

    if ch % _sublane_multiple(in_dtype) == 0:
        # Read q/k/v straight out of the packed (B, 3C, T) tensor: the channel
        # *block index* (0/1/2) of each BlockSpec selects the slab (no HBM split).
        q_in = k_in = v_in = x3
        offs = (0, 1, 2)
    else:
        # TODO(synk): pad ch to the sublane multiple instead of slicing (this
        # fallback adds an extra HBM pass for the split).
        q_in = x3[:, :ch, :]
        k_in = x3[:, ch:2 * ch, :]
        v_in = x3[:, 2 * ch:, :]
        offs = (0, 0, 0)
    oq, ok, ov = offs

    # K/V block index depends only on the head-block axis, so Pallas skips the
    # DMA across consecutive q-tiles: K/V are fetched once per head-block.
    in_specs = [
        pl.BlockSpec((bb, ch, tq),     lambda b, qi, _o=oq: (b, _o, qi)),
        pl.BlockSpec((bb, ch, length), lambda b, qi, _o=ok: (b, _o, 0)),
        pl.BlockSpec((bb, ch, length), lambda b, qi, _o=ov: (b, _o, 0)),
    ]
    out_spec = pl.BlockSpec((bb, ch, tq), lambda b, qi: (b, 0, qi))

    cost = pl.CostEstimate(
        flops=4 * B * length * length * ch,              # QK^T + PV
        transcendentals=B * length * length,             # softmax exps
        bytes_accessed=4 * B * ch * length * itemsize,   # q+k+v read, out write
    )

    out = pl.pallas_call(
        partial(_attn_kernel, scale_sq=scale_sq,
                compute_dtype=compute_dtype, exp_dtype=exp_dtype),
        out_shape=jax.ShapeDtypeStruct((B, ch, length), in_dtype),
        grid_spec=pltpu.PrefetchScalarGridSpec(
            num_scalar_prefetch=0,
            grid=(nb, n_q),
            in_specs=in_specs,
            out_specs=out_spec,
        ),
        compiler_params=pltpu.CompilerParams(
            dimension_semantics=("parallel", "parallel")),
        cost_estimate=cost,
    )(q_in, k_in, v_in)

    return out.reshape(bs, n_heads * ch, length)


class QKVAttentionLegacy:
    """Thin module wrapper matching the PyTorch interface."""

    def __init__(self, n_heads):
        self.n_heads = n_heads

    def __call__(self, qkv, *unused):
        return qkv_attention_legacy(qkv, self.n_heads)


# ---------------------------------------------------------------------------
# Pure-JAX reference (mirrors the PyTorch forward)
# ---------------------------------------------------------------------------
def qkv_attention_ref(qkv, n_heads):
    bs, width, length = qkv.shape
    ch = width // (3 * n_heads)
    x = qkv.reshape(bs * n_heads, 3 * ch, length)
    q, k, v = x[:, :ch], x[:, ch:2 * ch], x[:, 2 * ch:]
    scale = 1.0 / math.sqrt(math.sqrt(ch))
    w = jnp.einsum('bct,bcs->bts', q * scale, k * scale)
    w = jax.nn.softmax(w.astype(jnp.float32), axis=-1).astype(qkv.dtype)
    a = jnp.einsum('bts,bcs->bct', w, v)
    return a.reshape(bs, -1, length)


# ---------------------------------------------------------------------------
if __name__ == "__main__":
    key = jax.random.PRNGKey(0)
    k1, k2 = jax.random.split(key)

    # Case 1: small smoke test — N=2, heads=2, C=32, T=16 (single q tile,
    # head-block bb=2 exercised).
    n_heads, N, ch, T = 2, 2, 32, 16
    qkv = jax.random.normal(k1, (N, n_heads * 3 * ch, T), dtype=jnp.float32)
    attn = QKVAttentionLegacy(n_heads)
    out = jax.block_until_ready(attn(qkv))
    assert out.shape == (N, n_heads * ch, T)
    ref = qkv_attention_ref(qkv, n_heads)
    # bf16-compute path: bf16-appropriate tolerance.
    assert jnp.allclose(out, ref, rtol=5e-2, atol=5e-2), "mismatch (small, bf16)"
    # f32-compute path: tight check of the kernel math.
    out_f32 = jax.block_until_ready(
        qkv_attention_legacy(qkv, n_heads,
                             compute_dtype=jnp.float32, exp_dtype=jnp.float32))
    assert jnp.allclose(out_f32, ref, rtol=2e-3, atol=2e-3), "mismatch (small, f32)"

    # Case 2: N=2, heads=4, C=64, T=256 with tq=128 — exercises multiple q
    # tiles with resident K/V (DMA skipped across q tiles) and batched heads.
    n_heads2, N2, ch2, T2 = 4, 2, 64, 256
    qkv2 = jax.random.normal(k2, (N2, n_heads2 * 3 * ch2, T2), dtype=jnp.float32)
    ref2 = qkv_attention_ref(qkv2, n_heads2)
    out2 = jax.block_until_ready(
        qkv_attention_legacy(qkv2, n_heads2, tq=128))
    assert jnp.allclose(out2, ref2, rtol=5e-2, atol=5e-2), "mismatch (tiled, bf16)"
    out2_f32 = jax.block_until_ready(
        qkv_attention_legacy(qkv2, n_heads2, tq=128,
                             compute_dtype=jnp.float32, exp_dtype=jnp.float32))
    assert jnp.allclose(out2_f32, ref2, rtol=2e-3, atol=2e-3), "mismatch (tiled, f32)"

    print("KERNEL_OK")
</pallas_src>

<mosaic_0001>
module attributes {stable_mosaic.version = 11 : i64} {
  func.func @_attn_kernel(%arg0: i32, %arg1: i32, %arg2: memref<2x32x16xf32, #tpu.memory_space<vmem>>, %arg3: memref<2x32x16xf32, #tpu.memory_space<vmem>>, %arg4: memref<2x32x16xf32, #tpu.memory_space<vmem>>, %arg5: memref<2x32x16xf32, #tpu.memory_space<vmem>>) attributes {dimension_semantics = [#tpu.dimension_semantics<parallel>, #tpu.dimension_semantics<parallel>], iteration_bounds = array<i64: 2, 1>, scalar_prefetch = 0 : i64, scratch_operands = 0 : i64, tpu.core_type = #tpu.core_type<tc>, window_params = [{transform_indices = @transform_0, window_bounds = array<i64: 2, 32, 16>}, {transform_indices = @transform_1, window_bounds = array<i64: 2, 32, 16>}, {transform_indices = @transform_2, window_bounds = array<i64: 2, 32, 16>}, {transform_indices = @transform_3, window_bounds = array<i64: 2, 32, 16>}]} {
    %c0 = arith.constant 0 : index
    %c0_0 = arith.constant 0 : index
    %c0_1 = arith.constant 0 : index
    %0 = vector.load %arg2[%c0, %c0_0, %c0_1] : memref<2x32x16xf32, #tpu.memory_space<vmem>>, vector<2x32x16xf32>
    %cst = arith.constant 0.176776692 : f32
    %1 = vector.broadcast %cst : f32 to vector<2x32x16xf32>
    %2 = arith.mulf %0, %1 : vector<2x32x16xf32>
    %3 = arith.truncf %2 : vector<2x32x16xf32> to vector<2x32x16xbf16>
    %c0_2 = arith.constant 0 : index
    %c0_3 = arith.constant 0 : index
    %c0_4 = arith.constant 0 : index
    %4 = vector.load %arg3[%c0_2, %c0_3, %c0_4] : memref<2x32x16xf32, #tpu.memory_space<vmem>>, vector<2x32x16xf32>
    %5 = arith.truncf %4 : vector<2x32x16xf32> to vector<2x32x16xbf16>
    %c0_5 = arith.constant 0 : index
    %c0_6 = arith.constant 0 : index
    %c0_7 = arith.constant 0 : index
    %6 = vector.load %arg4[%c0_5, %c0_6, %c0_7] : memref<2x32x16xf32, #tpu.memory_space<vmem>>, vector<2x32x16xf32>
    %7 = arith.truncf %6 : vector<2x32x16xf32> to vector<2x32x16xbf16>
    %cst_8 = arith.constant dense<0.000000e+00> : vector<2x16x16xf32>
    %8 = tpu.matmul %5, %3, %cst_8 {dimension_numbers = #tpu.dot_dimension_numbers<[1], [1], [2], [2], [0, 0, 0, 2, 1, 2], [0], [0]>} : vector<2x32x16xbf16>, vector<2x32x16xbf16>, vector<2x16x16xf32> -> vector<2x16x16xf32>
    %cst_9 = arith.constant dense<0xFF800000> : vector<2x16xf32>
    %9 = vector.multi_reduction <maximumf>, %8, %cst_9 [1] : vector<2x16x16xf32> to vector<2x16xf32>
    %10 = vector.shape_cast %9 : vector<2x16xf32> to vector<2x1x16xf32>
    %11 = vector.broadcast %10 : vector<2x1x16xf32> to vector<2x16x16xf32>
    %12 = arith.subf %8, %11 : vector<2x16x16xf32>
    %13 = arith.truncf %12 : vector<2x16x16xf32> to vector<2x16x16xbf16>
    %14 = math.exp %13 : vector<2x16x16xbf16>
    %15 = arith.extf %14 : vector<2x16x16xbf16> to vector<2x16x16xf32>
    %cst_10 = arith.constant dense<0.000000e+00> : vector<2x16xf32>
    %16 = vector.multi_reduction <add>, %15, %cst_10 [1] : vector<2x16x16xf32> to vector<2x16xf32>
    %17 = vector.shape_cast %16 : vector<2x16xf32> to vector<2x1x16xf32>
    %18 = tpu.reciprocal %17 {approx = true} : vector<2x1x16xf32> -> vector<2x1x16xf32>
    %cst_11 = arith.constant dense<0.000000e+00> : vector<2x32x16xf32>
    %19 = tpu.matmul %7, %14, %cst_11 {dimension_numbers = #tpu.dot_dimension_numbers<[2], [1], [1], [2], [0, 0, 0, 1, 1, 2], [0], [0]>} : vector<2x32x16xbf16>, vector<2x16x16xbf16>, vector<2x32x16xf32> -> vector<2x32x16xf32>
    %20 = vector.broadcast %18 : vector<2x1x16xf32> to vector<2x32x16xf32>
    %21 = arith.mulf %19, %20 : vector<2x32x16xf32>
    %c0_12 = arith.constant 0 : index
    %c0_13 = arith.constant 0 : index
    %c0_14 = arith.constant 0 : index
    %22 = vector.load %arg5[%c0_12, %c0_13, %c0_14] : memref<2x32x16xf32, #tpu.memory_space<vmem>>, vector<2x32x16xf32>
    tpu.vector_store %arg5[%c0_12, %c0_13, %c0_14], %21 {strides = array<i32>} : memref<2x32x16xf32, #tpu.memory_space<vmem>>, vector<2x32x16xf32>,
    return
  }
  func.func @transform_0(%arg0: i32, %arg1: i32) -> (i32, i32, i32) {
    %c0_i32 = arith.constant 0 : i32
    %c0_i32_0 = arith.constant 0 : i32
    return %arg0, %c0_i32, %arg1 : i32, i32, i32
  }
  func.func @transform_1(%arg0: i32, %arg1: i32) -> (i32, i32, i32) {
    %c1_i32 = arith.constant 1 : i32
    %c0_i32 = arith.constant 0 : i32
    %c0_i32_0 = arith.constant 0 : i32
    return %arg0, %c1_i32, %c0_i32 : i32, i32, i32
  }
  func.func @transform_2(%arg0: i32, %arg1: i32) -> (i32, i32, i32) {
    %c2_i32 = arith.constant 2 : i32
    %c0_i32 = arith.constant 0 : i32
    %c0_i32_0 = arith.constant 0 : i32
    return %arg0, %c2_i32, %c0_i32 : i32, i32, i32
  }
  func.func @transform_3(%arg0: i32, %arg1: i32) -> (i32, i32, i32) {
    %c0_i32 = arith.constant 0 : i32
    %c0_i32_0 = arith.constant 0 : i32
    return %arg0, %c0_i32, %arg1 : i32, i32, i32
  }
}

</mosaic_0001>

<llo_original>
// kernel: tpu_custom_call.1
$region0: #{tpu_custom_call.1}
  #allocation0 [shape = 'u32[]', space=smem, size = 0x4, offset = 0x4, fixed_abs, tag = 'smem constant byte address 0x4 - core index']
  #allocation1 [shape = 'u32[144,128]{1,0:T(1,128)}', space=vmem, size = 0x12000, scoped, tag = 'internal scratch']
  %s0 = inlined_call_operand.vmem [shape: f32[4,96,16], index: 0, kind: input, shape index: {}]
  %s1 = inlined_call_operand.vmem [shape: f32[4,96,16], index: 1, kind: input, shape index: {}]
  %s2 = inlined_call_operand.vmem [shape: f32[4,96,16], index: 2, kind: input, shape index: {}]
  %s3 = inlined_call_operand.vmem [shape: f32[4,32,16], index: 3, kind: output, shape index: {}]
  %s4 = sld [smem:[#allocation0]]
  $region159: #{tpu_custom_call.1} parent=0
    _
  %s6 = ssub.s32 1, %s4
  %s7 = scalar_select 0, %s6, %s4
  $region1: #{tpu_custom_call.1} parent=0
    #allocation2 [shape = 'u8[65536]{0}', space=vmem, size = 0x10000, scoped, tag = 'input window, operand 0']
    #allocation3 [shape = 'u8[65536]{0}', space=vmem, size = 0x10000, scoped, tag = 'input window, operand 1']
    #allocation4 [shape = 'u8[65536]{0}', space=vmem, size = 0x10000, scoped, tag = 'input window, operand 2']
    loop: start=0, step=1, limit=4
    $region2: #{tpu_custom_call.1} parent=1 // loop_pre_header
      _
    $region3: #{tpu_custom_call.1} parent=1 // loop_header
      %s9 = sphi 0, %s13
      %p10 = scmp.ge.s32.totalorder %s9, 4
      %s16 = sphi 0, %s28
      %s17 = sphi 0, %s24
      %s18 = sphi 0, %s16
      %s19 = sphi 0, %s17
      %s20 = sphi 0, %s18
      %s21 = sphi 0, %s19
      %s33 = sphi 0, %s35
      %s36 = sphi 0, %s33
      %s37 = sphi 0, %s36
      %s53 = sphi 0, %s37
      %s59 = sphi 0, %s61
      %s62 = sphi 0, %s59
      %s63 = sphi 0, %s62
      %s79 = sphi 0, %s63
      %s85 = sphi 0, %s87
      %s88 = sphi 0, %s85
      %s89 = sphi 0, %s88
      %s105 = sphi 0, %s89
      %s113 = sphi 0, %s115
      %s116 = sphi 0, %s113
      %s117 = sphi 0, %s116
      %s133 = sphi 0, %s117
    $region4: #{tpu_custom_call.1} parent=1 // loop_header_branch
      %12 = sbr.rel (%p10) target = $region8
    $region5: #{tpu_custom_call.1} parent=1 // loop_body
      %s14 = ssub.s32 %s9, 1
      %s15 = ssub.s32 %s9, 2
      %s22 = sadd.s32 1, %s17
      %p23 = scmp.ge.s32.totalorder %s22, 1
      %s24 = scalar_select %p23, 0, %s22
      %s25 = sadd.s32 1, %s16
      %s26 = scalar_select %p23, %s25, %s16
      %p27 = scmp.ge.s32.totalorder %s26, 2
      %s28 = scalar_select %p27, 0, %s26
      %s29 = ssub.s32 %s16, %s28
      %s30 = ssub.s32 %s17, %s24
      %s31 = sor.u32 %s29, %s30
      %p32 = scmp.eq.s32.totalorder %s31, 0
      %s34 = sadd.s32 %s33, 1
      %s35 = scalar_select %p32, %s33, %s34
      %p38 = pneg %p32
      %p39 = scmp.eq.s32.totalorder %s9, 1
      %p40 = por %p38, %p39
      %p41 = scmp.ne.s32.totalorder %s33, %s36
      %p42 = scmp.eq.s32.totalorder %s9, 0
      %p43 = por %p41, %p42
      %p44 = scmp.ne.s32.totalorder %s33, %s36
      %p45 = scmp.eq.s32.totalorder %s14, 1
      %p46 = por %p44, %p45
      %p47 = scmp.ne.s32.totalorder %s36, %s37
      %p48 = scmp.eq.s32.totalorder %s14, 0
      %p49 = por %p47, %p48
      %p50 = scmp.ne.s32.totalorder %s36, %s37
      %p51 = scmp.eq.s32.totalorder %s15, 1
      %p52 = por %p50, %p51
      %p54 = scmp.ne.s32.totalorder %s37, %s53
      %p55 = scmp.eq.s32.totalorder %s15, 0
      %p56 = por %p54, %p55
      %s57 = ssub.s32 %s16, %s28
      %p58 = scmp.eq.s32.totalorder %s57, 0
      %s60 = sadd.s32 %s59, 1
      %s61 = scalar_select %p58, %s59, %s60
      %p64 = pneg %p58
      %p65 = scmp.eq.s32.totalorder %s9, 1
      %p66 = por %p64, %p65
      %p67 = scmp.ne.s32.totalorder %s59, %s62
      %p68 = scmp.eq.s32.totalorder %s9, 0
      %p69 = por %p67, %p68
      %p70 = scmp.ne.s32.totalorder %s59, %s62
      %p71 = scmp.eq.s32.totalorder %s14, 1
      %p72 = por %p70, %p71
      %p73 = scmp.ne.s32.totalorder %s62, %s63
      %p74 = scmp.eq.s32.totalorder %s14, 0
      %p75 = por %p73, %p74
      %p76 = scmp.ne.s32.totalorder %s62, %s63
      %p77 = scmp.eq.s32.totalorder %s15, 1
      %p78 = por %p76, %p77
      %p80 = scmp.ne.s32.totalorder %s63, %s79
      %p81 = scmp.eq.s32.totalorder %s15, 0
      %p82 = por %p80, %p81
      %s83 = ssub.s32 %s16, %s28
      %p84 = scmp.eq.s32.totalorder %s83, 0
      %s86 = sadd.s32 %s85, 1
      %s87 = scalar_select %p84, %s85, %s86
      %p90 = pneg %p84
      %p91 = scmp.eq.s32.totalorder %s9, 1
      %p92 = por %p90, %p91
      %p93 = scmp.ne.s32.totalorder %s85, %s88
      %p94 = scmp.eq.s32.totalorder %s9, 0
      %p95 = por %p93, %p94
      %p96 = scmp.ne.s32.totalorder %s85, %s88
      %p97 = scmp.eq.s32.totalorder %s14, 1
      %p98 = por %p96, %p97
      %p99 = scmp.ne.s32.totalorder %s88, %s89
      %p100 = scmp.eq.s32.totalorder %s14, 0
      %p101 = por %p99, %p100
      %p102 = scmp.ne.s32.totalorder %s88, %s89
      %p103 = scmp.eq.s32.totalorder %s15, 1
      %p104 = por %p102, %p103
      %p106 = scmp.ne.s32.totalorder %s89, %s105
      %p107 = scmp.eq.s32.totalorder %s15, 0
      %p108 = por %p106, %p107
      %s109 = ssub.s32 %s16, %s28
      %s110 = ssub.s32 %s17, %s24
      %s111 = sor.u32 %s109, %s110
      %p112 = scmp.eq.s32.totalorder %s111, 0
      %s114 = sadd.s32 %s113, 1
      %s115 = scalar_select %p112, %s113, %s114
      %p118 = pneg %p112
      %p119 = scmp.eq.s32.totalorder %s9, 1
      %p120 = por %p118, %p119
      %p121 = scmp.ne.s32.totalorder %s113, %s116
      %p122 = scmp.eq.s32.totalorder %s9, 0
      %p123 = por %p121, %p122
      %p124 = scmp.ne.s32.totalorder %s113, %s116
      %p125 = scmp.eq.s32.totalorder %s14, 1
      %p126 = por %p124, %p125
      %p127 = scmp.ne.s32.totalorder %s116, %s117
      %p128 = scmp.eq.s32.totalorder %s14, 0
      %p129 = por %p127, %p128
      %p130 = scmp.ne.s32.totalorder %s116, %s117
      %p131 = scmp.eq.s32.totalorder %s15, 1
      %p132 = por %p130, %p131
      %p134 = scmp.ne.s32.totalorder %s117, %s133
      %p135 = scmp.eq.s32.totalorder %s15, 0
      %p136 = por %p134, %p135
      %p137 = scmp.le.s32.totalorder 1, %s9
      %p138 = scmp.lt.s32.totalorder %s9, 3
      %p139 = pnand %p137, %p138
      %p140 = pneg %p139
      // Predicated region
      $region9: #{tpu_custom_call.1} parent=5 // pred_check
        _
      $region10: #{tpu_custom_call.1} parent=5 // pred_check_branch
        %142 = sbr.rel (%p139) target = $region12
      $region11: #{tpu_custom_call.1} parent=5 // pred_region
        %s143 = ssub.s32 %s9, 1
      $region12: #{tpu_custom_call.1} parent=5 // pred_fallthru
        _
      %p144 = scmp.lt.s32.totalorder %s9, 2
      // Predicated region
      $region13: #{tpu_custom_call.1} parent=5 // pred_check
        %p145 = pneg %p144
      $region14: #{tpu_custom_call.1} parent=5 // pred_check_branch
        %147 = sbr.rel (%p145) target = $region16
      $region15: #{tpu_custom_call.1} parent=5 // pred_region
        // Predicated region
        $region17: #{tpu_custom_call.1} parent=15 // pred_check
          %p148 = pneg %p43
        $region18: #{tpu_custom_call.1} parent=15 // pred_check_branch
          %150 = sbr.rel (%p148) target = $region20
        $region19: #{tpu_custom_call.1} parent=15 // pred_region
          %s151 = sand.u32 %s33, 1
          %s152 = sand.u32 %s33, 1
          %s153 = smul.addr %s152, 64
          %s154 = scalar_lea.vmem [#allocation2], %s153
          %s155 = smul.u32 2, %s16
          %s156 = smul.addr %s155, 12
          %s157 = sadd.s32 %s17, %s156
          %s158 = smul.addr %s157, 8
          %s159 = scalar_lea.vmem %s0, %s158
          // Predicated region
          $region21: #{tpu_custom_call.1} parent=19 // pred_check
            _
          $region22: #{tpu_custom_call.1} parent=19 // pred_check_branch
            %161 = sbr.rel (0) target = $region24
          $region23: #{tpu_custom_call.1} parent=19 // pred_region
            // Predicated region
            $region25: #{tpu_custom_call.1} parent=23 // pred_check
              _
            $region26: #{tpu_custom_call.1} parent=23 // pred_check_branch
              %163 = sbr.rel (0) target = $region28
            $region27: #{tpu_custom_call.1} parent=23 // pred_region
              // Predicated region
              $region40: #{tpu_custom_call.1} parent=27 // pred_check
                _
              $region41: #{tpu_custom_call.1} parent=27 // pred_check_branch
                %193 = sbr.rel (0) target = $region43
              $region42: #{tpu_custom_call.1} parent=27 // pred_region
                loop: start=0, step=1, limit=1
                $region44: #{tpu_custom_call.1} parent=42 // loop_pre_header
                  _
                $region45: #{tpu_custom_call.1} parent=42 // loop_header
                  %s195 = sphi 0, %s199
                  %p196 = scmp.ge.s32.totalorder %s195, 1
                  %s200 = sphi %s159, %s159
                  %s201 = sphi %s154, %s154
                $region46: #{tpu_custom_call.1} parent=42 // loop_header_branch
                  %198 = sbr.rel (%p196) target = $region50
                $region47: #{tpu_custom_call.1} parent=42 // loop_body
                  %v202 = vld [vmem:[%s200] sm:$0xff]
                  %203 = vst [vmem:[%s201] sm:$0xff] %v202
                  %v204 = vld [vmem:[%s200 + $0x8] sm:$0xff]
                  %205 = vst [vmem:[%s201 + $0x8] sm:$0xff] %v204
                  %v206 = vld [vmem:[%s200 + $0x10] sm:$0xff]
                  %207 = vst [vmem:[%s201 + $0x10] sm:$0xff] %v206
                  %v208 = vld [vmem:[%s200 + $0x18] sm:$0xff]
                  %209 = vst [vmem:[%s201 + $0x18] sm:$0xff] %v208
                  %v210 = vld [vmem:[%s200 + $0x60] sm:$0xff]
                  %211 = vst [vmem:[%s201 + $0x20] sm:$0xff] %v210
                  %v212 = vld [vmem:[%s200 + $0x68] sm:$0xff]
                  %213 = vst [vmem:[%s201 + $0x28] sm:$0xff] %v212
                  %v214 = vld [vmem:[%s200 + $0x70] sm:$0xff]
                  %215 = vst [vmem:[%s201 + $0x30] sm:$0xff] %v214
                  %v216 = vld [vmem:[%s200 + $0x78] sm:$0xff]
                  %217 = vst [vmem:[%s201 + $0x38] sm:$0xff] %v216
                $region48: #{tpu_custom_call.1} parent=42 // loop_footer
                  %s199 = sadd.s32 1, %s195
                $region49: #{tpu_custom_call.1} parent=42 // loop_footer_branch
                  %194 = sbr.rel target = $region45
                $region50: #{tpu_custom_call.1} parent=42 // loop_exit
                  _
              $region43: #{tpu_custom_call.1} parent=27 // pred_fallthru
                _
              // Predicated region
              $region51: #{tpu_custom_call.1} parent=27 // pred_check
                _
              $region52: #{tpu_custom_call.1} parent=27 // pred_check_branch
                %219 = sbr.rel target = $region54
              $region53: #{tpu_custom_call.1} parent=27 // pred_region
                _
              $region54: #{tpu_custom_call.1} parent=27 // pred_fallthru
                _
            $region28: #{tpu_custom_call.1} parent=23 // pred_fallthru
              _
            // Predicated region
            $region29: #{tpu_custom_call.1} parent=23 // pred_check
              _
            $region30: #{tpu_custom_call.1} parent=23 // pred_check_branch
              %165 = sbr.rel target = $region32
            $region31: #{tpu_custom_call.1} parent=23 // pred_region
              %s167 = ssub.s32 256, 1
              loop: start=0, step=1, limit=1
              $region33: #{tpu_custom_call.1} parent=31 // loop_pre_header
                _
              $region34: #{tpu_custom_call.1} parent=31 // loop_header
                %s169 = sphi 0, %s173
                %p170 = scmp.ge.s32.totalorder %s169, 1
                %s174 = sphi %s159, %s159
                %s175 = sphi %s154, %s154
              $region35: #{tpu_custom_call.1} parent=31 // loop_header_branch
                %172 = sbr.rel (%p170) target = $region39
              $region36: #{tpu_custom_call.1} parent=31 // loop_body
                %v176 = vld [vmem:[%s174] sm:%s167]
                %177 = vst [vmem:[%s175] sm:%s167] %v176
                %v178 = vld [vmem:[%s174 + $0x8] sm:%s167]
                %179 = vst [vmem:[%s175 + $0x8] sm:%s167] %v178
                %v180 = vld [vmem:[%s174 + $0x10] sm:%s167]
                %181 = vst [vmem:[%s175 + $0x10] sm:%s167] %v180
                %v182 = vld [vmem:[%s174 + $0x18] sm:%s167]
                %183 = vst [vmem:[%s175 + $0x18] sm:%s167] %v182
                %v184 = vld [vmem:[%s174 + $0x60] sm:%s167]
                %185 = vst [vmem:[%s175 + $0x20] sm:%s167] %v184
                %v186 = vld [vmem:[%s174 + $0x68] sm:%s167]
                %187 = vst [vmem:[%s175 + $0x28] sm:%s167] %v186
                %v188 = vld [vmem:[%s174 + $0x70] sm:%s167]
                %189 = vst [vmem:[%s175 + $0x30] sm:%s167] %v188
                %v190 = vld [vmem:[%s174 + $0x78] sm:%s167]
                %191 = vst [vmem:[%s175 + $0x38] sm:%s167] %v190
              $region37: #{tpu_custom_call.1} parent=31 // loop_footer
                %s173 = sadd.s32 1, %s169
              $region38: #{tpu_custom_call.1} parent=31 // loop_footer_branch
                %168 = sbr.rel target = $region34
              $region39: #{tpu_custom_call.1} parent=31 // loop_exit
                _
            $region32: #{tpu_custom_call.1} parent=23 // pred_fallthru
              _
          $region24: #{tpu_custom_call.1} parent=19 // pred_fallthru
            _
          %220 = vnop
        $region20: #{tpu_custom_call.1} parent=15 // pred_fallthru
          _
        // Predicated region
        $region55: #{tpu_custom_call.1} parent=15 // pred_check
          %p221 = pneg %p69
        $region56: #{tpu_custom_call.1} parent=15 // pred_check_branch
          %223 = sbr.rel (%p221) target = $region58
        $region57: #{tpu_custom_call.1} parent=15 // pred_region
          %s224 = sand.u32 %s59, 1
          %s225 = sand.u32 %s59, 1
          %s226 = smul.addr %s225, 64
          %s227 = scalar_lea.vmem [#allocation3], %s226
          %s228 = smul.u32 2, %s16
          %s229 = smul.addr %s228, 12
          %s230 = sadd.s32 4, %s229
          %s231 = smul.addr %s230, 8
          %s232 = scalar_lea.vmem %s1, %s231
          // Predicated region
          $region59: #{tpu_custom_call.1} parent=57 // pred_check
            _
          $region60: #{tpu_custom_call.1} parent=57 // pred_check_branch
            %234 = sbr.rel (0) target = $region62
          $region61: #{tpu_custom_call.1} parent=57 // pred_region
            // Predicated region
            $region63: #{tpu_custom_call.1} parent=61 // pred_check
              _
            $region64: #{tpu_custom_call.1} parent=61 // pred_check_branch
              %236 = sbr.rel (0) target = $region66
            $region65: #{tpu_custom_call.1} parent=61 // pred_region
              // Predicated region
              $region78: #{tpu_custom_call.1} parent=65 // pred_check
                _
              $region79: #{tpu_custom_call.1} parent=65 // pred_check_branch
                %266 = sbr.rel (0) target = $region81
              $region80: #{tpu_custom_call.1} parent=65 // pred_region
                loop: start=0, step=1, limit=1
                $region82: #{tpu_custom_call.1} parent=80 // loop_pre_header
                  _
                $region83: #{tpu_custom_call.1} parent=80 // loop_header
                  %s268 = sphi 0, %s272
                  %p269 = scmp.ge.s32.totalorder %s268, 1
                  %s273 = sphi %s232, %s232
                  %s274 = sphi %s227, %s227
                $region84: #{tpu_custom_call.1} parent=80 // loop_header_branch
                  %271 = sbr.rel (%p269) target = $region88
                $region85: #{tpu_custom_call.1} parent=80 // loop_body
                  %v275 = vld [vmem:[%s273] sm:$0xff]
                  %276 = vst [vmem:[%s274] sm:$0xff] %v275
                  %v277 = vld [vmem:[%s273 + $0x8] sm:$0xff]
                  %278 = vst [vmem:[%s274 + $0x8] sm:$0xff] %v277
                  %v279 = vld [vmem:[%s273 + $0x10] sm:$0xff]
                  %280 = vst [vmem:[%s274 + $0x10] sm:$0xff] %v279
                  %v281 = vld [vmem:[%s273 + $0x18] sm:$0xff]
                  %282 = vst [vmem:[%s274 + $0x18] sm:$0xff] %v281
                  %v283 = vld [vmem:[%s273 + $0x60] sm:$0xff]
                  %284 = vst [vmem:[%s274 + $0x20] sm:$0xff] %v283
                  %v285 = vld [vmem:[%s273 + $0x68] sm:$0xff]
                  %286 = vst [vmem:[%s274 + $0x28] sm:$0xff] %v285
                  %v287 = vld [vmem:[%s273 + $0x70] sm:$0xff]
                  %288 = vst [vmem:[%s274 + $0x30] sm:$0xff] %v287
                  %v289 = vld [vmem:[%s273 + $0x78] sm:$0xff]
                  %290 = vst [vmem:[%s274 + $0x38] sm:$0xff] %v289
                $region86: #{tpu_custom_call.1} parent=80 // loop_footer
                  %s272 = sadd.s32 1, %s268
                $region87: #{tpu_custom_call.1} parent=80 // loop_footer_branch
                  %267 = sbr.rel target = $region83
                $region88: #{tpu_custom_call.1} parent=80 // loop_exit
                  _
              $region81: #{tpu_custom_call.1} parent=65 // pred_fallthru
                _
              // Predicated region
              $region89: #{tpu_custom_call.1} parent=65 // pred_check
                _
              $region90: #{tpu_custom_call.1} parent=65 // pred_check_branch
                %292 = sbr.rel target = $region92
              $region91: #{tpu_custom_call.1} parent=65 // pred_region
                _
              $region92: #{tpu_custom_call.1} parent=65 // pred_fallthru
                _
            $region66: #{tpu_custom_call.1} parent=61 // pred_fallthru
              _
            // Predicated region
            $region67: #{tpu_custom_call.1} parent=61 // pred_check
              _
            $region68: #{tpu_custom_call.1} parent=61 // pred_check_branch
              %238 = sbr.rel target = $region70
            $region69: #{tpu_custom_call.1} parent=61 // pred_region
              %s240 = ssub.s32 256, 1
              loop: start=0, step=1, limit=1
              $region71: #{tpu_custom_call.1} parent=69 // loop_pre_header
                _
              $region72: #{tpu_custom_call.1} parent=69 // loop_header
                %s242 = sphi 0, %s246
                %p243 = scmp.ge.s32.totalorder %s242, 1
                %s247 = sphi %s232, %s232
                %s248 = sphi %s227, %s227
              $region73: #{tpu_custom_call.1} parent=69 // loop_header_branch
                %245 = sbr.rel (%p243) target = $region77
              $region74: #{tpu_custom_call.1} parent=69 // loop_body
                %v249 = vld [vmem:[%s247] sm:%s240]
                %250 = vst [vmem:[%s248] sm:%s240] %v249
                %v251 = vld [vmem:[%s247 + $0x8] sm:%s240]
                %252 = vst [vmem:[%s248 + $0x8] sm:%s240] %v251
                %v253 = vld [vmem:[%s247 + $0x10] sm:%s240]
                %254 = vst [vmem:[%s248 + $0x10] sm:%s240] %v253
                %v255 = vld [vmem:[%s247 + $0x18] sm:%s240]
                %256 = vst [vmem:[%s248 + $0x18] sm:%s240] %v255
                %v257 = vld [vmem:[%s247 + $0x60] sm:%s240]
                %258 = vst [vmem:[%s248 + $0x20] sm:%s240] %v257
                %v259 = vld [vmem:[%s247 + $0x68] sm:%s240]
                %260 = vst [vmem:[%s248 + $0x28] sm:%s240] %v259
                %v261 = vld [vmem:[%s247 + $0x70] sm:%s240]
                %262 = vst [vmem:[%s248 + $0x30] sm:%s240] %v261
                %v263 = vld [vmem:[%s247 + $0x78] sm:%s240]
                %264 = vst [vmem:[%s248 + $0x38] sm:%s240] %v263
              $region75: #{tpu_custom_call.1} parent=69 // loop_footer
                %s246 = sadd.s32 1, %s242
              $region76: #{tpu_custom_call.1} parent=69 // loop_footer_branch
                %241 = sbr.rel target = $region72
              $region77: #{tpu_custom_call.1} parent=69 // loop_exit
                _
            $region70: #{tpu_custom_call.1} parent=61 // pred_fallthru
              _
          $region62: #{tpu_custom_call.1} parent=57 // pred_fallthru
            _
          %293 = vnop
        $region58: #{tpu_custom_call.1} parent=15 // pred_fallthru
          _
        // Predicated region
        $region93: #{tpu_custom_call.1} parent=15 // pred_check
          %p294 = pneg %p95
        $region94: #{tpu_custom_call.1} parent=15 // pred_check_branch
          %296 = sbr.rel (%p294) target = $region96
        $region95: #{tpu_custom_call.1} parent=15 // pred_region
          %s297 = sand.u32 %s85, 1
          %s298 = sand.u32 %s85, 1
          %s299 = smul.addr %s298, 64
          %s300 = scalar_lea.vmem [#allocation4], %s299
          %s301 = smul.u32 2, %s16
          %s302 = smul.addr %s301, 12
          %s303 = sadd.s32 8, %s302
          %s304 = smul.addr %s303, 8
          %s305 = scalar_lea.vmem %s2, %s304
          // Predicated region
          $region97: #{tpu_custom_call.1} parent=95 // pred_check
            _
          $region98: #{tpu_custom_call.1} parent=95 // pred_check_branch
            %307 = sbr.rel (0) target = $region100
          $region99: #{tpu_custom_call.1} parent=95 // pred_region
            // Predicated region
            $region101: #{tpu_custom_call.1} parent=99 // pred_check
              _
            $region102: #{tpu_custom_call.1} parent=99 // pred_check_branch
              %309 = sbr.rel (0) target = $region104
            $region103: #{tpu_custom_call.1} parent=99 // pred_region
              // Predicated region
              $region116: #{tpu_custom_call.1} parent=103 // pred_check
                _
              $region117: #{tpu_custom_call.1} parent=103 // pred_check_branch
                %339 = sbr.rel (0) target = $region119
              $region118: #{tpu_custom_call.1} parent=103 // pred_region
                loop: start=0, step=1, limit=1
                $region120: #{tpu_custom_call.1} parent=118 // loop_pre_header
                  _
                $region121: #{tpu_custom_call.1} parent=118 // loop_header
                  %s341 = sphi 0, %s345
                  %p342 = scmp.ge.s32.totalorder %s341, 1
                  %s346 = sphi %s305, %s305
                  %s347 = sphi %s300, %s300
                $region122: #{tpu_custom_call.1} parent=118 // loop_header_branch
                  %344 = sbr.rel (%p342) target = $region126
                $region123: #{tpu_custom_call.1} parent=118 // loop_body
                  %v348 = vld [vmem:[%s346] sm:$0xff]
                  %349 = vst [vmem:[%s347] sm:$0xff] %v348
                  %v350 = vld [vmem:[%s346 + $0x8] sm:$0xff]
                  %351 = vst [vmem:[%s347 + $0x8] sm:$0xff] %v350
                  %v352 = vld [vmem:[%s346 + $0x10] sm:$0xff]
                  %353 = vst [vmem:[%s347 + $0x10] sm:$0xff] %v352
                  %v354 = vld [vmem:[%s346 + $0x18] sm:$0xff]
                  %355 = vst [vmem:[%s347 + $0x18] sm:$0xff] %v354
                  %v356 = vld [vmem:[%s346 + $0x60] sm:$0xff]
                  %357 = vst [vmem:[%s347 + $0x20] sm:$0xff] %v356
                  %v358 = vld [vmem:[%s346 + $0x68] sm:$0xff]
                  %359 = vst [vmem:[%s347 + $0x28] sm:$0xff] %v358
                  %v360 = vld [vmem:[%s346 + $0x70] sm:$0xff]
                  %361 = vst [vmem:[%s347 + $0x30] sm:$0xff] %v360
                  %v362 = vld [vmem:[%s346 + $0x78] sm:$0xff]
                  %363 = vst [vmem:[%s347 + $0x38] sm:$0xff] %v362
                $region124: #{tpu_custom_call.1} parent=118 // loop_footer
                  %s345 = sadd.s32 1, %s341
                $region125: #{tpu_custom_call.1} parent=118 // loop_footer_branch
                  %340 = sbr.rel target = $region121
                $region126: #{tpu_custom_call.1} parent=118 // loop_exit
                  _
              $region119: #{tpu_custom_call.1} parent=103 // pred_fallthru
                _
              // Predicated region
              $region127: #{tpu_custom_call.1} parent=103 // pred_check
                _
              $region128: #{tpu_custom_call.1} parent=103 // pred_check_branch
                %365 = sbr.rel target = $region130
              $region129: #{tpu_custom_call.1} parent=103 // pred_region
                _
              $region130: #{tpu_custom_call.1} parent=103 // pred_fallthru
                _
            $region104: #{tpu_custom_call.1} parent=99 // pred_fallthru
              _
            // Predicated region
            $region105: #{tpu_custom_call.1} parent=99 // pred_check
              _
            $region106: #{tpu_custom_call.1} parent=99 // pred_check_branch
              %311 = sbr.rel target = $region108
            $region107: #{tpu_custom_call.1} parent=99 // pred_region
              %s313 = ssub.s32 256, 1
              loop: start=0, step=1, limit=1
              $region109: #{tpu_custom_call.1} parent=107 // loop_pre_header
                _
              $region110: #{tpu_custom_call.1} parent=107 // loop_header
                %s315 = sphi 0, %s319
                %p316 = scmp.ge.s32.totalorder %s315, 1
                %s320 = sphi %s305, %s305
                %s321 = sphi %s300, %s300
              $region111: #{tpu_custom_call.1} parent=107 // loop_header_branch
                %318 = sbr.rel (%p316) target = $region115
              $region112: #{tpu_custom_call.1} parent=107 // loop_body
                %v322 = vld [vmem:[%s320] sm:%s313]
                %323 = vst [vmem:[%s321] sm:%s313] %v322
                %v324 = vld [vmem:[%s320 + $0x8] sm:%s313]
                %325 = vst [vmem:[%s321 + $0x8] sm:%s313] %v324
                %v326 = vld [vmem:[%s320 + $0x10] sm:%s313]
                %327 = vst [vmem:[%s321 + $0x10] sm:%s313] %v326
                %v328 = vld [vmem:[%s320 + $0x18] sm:%s313]
                %329 = vst [vmem:[%s321 + $0x18] sm:%s313] %v328
                %v330 = vld [vmem:[%s320 + $0x60] sm:%s313]
                %331 = vst [vmem:[%s321 + $0x20] sm:%s313] %v330
                %v332 = vld [vmem:[%s320 + $0x68] sm:%s313]
                %333 = vst [vmem:[%s321 + $0x28] sm:%s313] %v332
                %v334 = vld [vmem:[%s320 + $0x70] sm:%s313]
                %335 = vst [vmem:[%s321 + $0x30] sm:%s313] %v334
                %v336 = vld [vmem:[%s320 + $0x78] sm:%s313]
                %337 = vst [vmem:[%s321 + $0x38] sm:%s313] %v336
              $region113: #{tpu_custom_call.1} parent=107 // loop_footer
                %s319 = sadd.s32 1, %s315
              $region114: #{tpu_custom_call.1} parent=107 // loop_footer_branch
                %314 = sbr.rel target = $region110
              $region115: #{tpu_custom_call.1} parent=107 // loop_exit
                _
            $region108: #{tpu_custom_call.1} parent=99 // pred_fallthru
              _
          $region100: #{tpu_custom_call.1} parent=95 // pred_fallthru
            _
          %366 = vnop
        $region96: #{tpu_custom_call.1} parent=15 // pred_fallthru
          _
      $region16: #{tpu_custom_call.1} parent=5 // pred_fallthru
        _
      %p367 = scmp.le.s32.totalorder 1, %s9
      %p368 = scmp.lt.s32.totalorder %s9, 3
      %p369 = pnand %p367, %p368
      %p370 = pneg %p369
      // Predicated region
      $region131: #{tpu_custom_call.1} parent=5 // pred_check
        _
      $region132: #{tpu_custom_call.1} parent=5 // pred_check_branch
        %372 = sbr.rel (%p369) target = $region134
      $region133: #{tpu_custom_call.1} parent=5 // pred_region
        %s373 = ssub.s32 %s9, 1
        %s374 = sand.u32 %s36, 1
        %s375 = sand.u32 %s36, 1
        %s376 = smul.addr %s375, 64
        %s377 = scalar_lea.vmem [#allocation2], %s376
        // Predicated region
        $region135: #{tpu_custom_call.1} parent=133 // pred_check
          %p378 = pneg %p49
        $region136: #{tpu_custom_call.1} parent=133 // pred_check_branch
          %380 = sbr.rel (%p378) target = $region138
        $region137: #{tpu_custom_call.1} parent=133 // pred_region
          _
        $region138: #{tpu_custom_call.1} parent=133 // pred_fallthru
          _
        %s381 = sand.u32 %s62, 1
        %s382 = sand.u32 %s62, 1
        %s383 = smul.addr %s382, 64
        %s384 = scalar_lea.vmem [#allocation3], %s383
        // Predicated region
        $region139: #{tpu_custom_call.1} parent=133 // pred_check
          %p385 = pneg %p75
        $region140: #{tpu_custom_call.1} parent=133 // pred_check_branch
          %387 = sbr.rel (%p385) target = $region142
        $region141: #{tpu_custom_call.1} parent=133 // pred_region
          _
        $region142: #{tpu_custom_call.1} parent=133 // pred_fallthru
          _
        %s388 = sand.u32 %s88, 1
        %s389 = sand.u32 %s88, 1
        %s390 = smul.addr %s389, 64
        %s391 = scalar_lea.vmem [#allocation4], %s390
        // Predicated region
        $region143: #{tpu_custom_call.1} parent=133 // pred_check
          %p392 = pneg %p101
        $region144: #{tpu_custom_call.1} parent=133 // pred_check_branch
          %394 = sbr.rel (%p392) target = $region146
        $region145: #{tpu_custom_call.1} parent=133 // pred_region
          _
        $region146: #{tpu_custom_call.1} parent=133 // pred_fallthru
          _
        %s395 = sand.u32 %s36, 1
        %s396 = sand.u32 %s36, 1
        %s397 = smul.addr %s396, 64
        %s398 = scalar_lea.vmem [#allocation2], %s397
        %p399 = pneg %p49
        %p400 = pneg %p46
        %s401 = sand.u32 %s62, 1
        %s402 = sand.u32 %s62, 1
        %s403 = smul.addr %s402, 64
        %s404 = scalar_lea.vmem [#allocation3], %s403
        %p405 = pneg %p75
        %p406 = pneg %p72
        %s407 = sand.u32 %s88, 1
        %s408 = sand.u32 %s88, 1
        %s409 = smul.addr %s408, 64
        %s410 = scalar_lea.vmem [#allocation4], %s409
        %p411 = pneg %p101
        %p412 = pneg %p98
        %p413 = pneg %p129
        %p414 = pneg %p126
        %s415 = smul.u32 2, %s18
        %p416 = scmp.lt.s32.totalorder %s415, 3
        %s417 = scalar_select %p416, %s415, 3
        %p418 = scmp.lt.s32.totalorder %s19, 0
        %s419 = scalar_select %p418, %s19, 0
        %s420 = smul.addr %s417, 4
        %s421 = sadd.s32 %s419, %s420
        %s422 = smul.addr %s421, 8
        %s423 = scalar_lea.vmem %s3, %s422
        %s424 = smul.u32 2, %s18
        %s425 = smul.u32 2, %s18
        %s426 = smul.u32 2, %s18
        %s427 = smul.u32 2, %s18
        %p428 = scmp.lt.s32.totalorder %s427, 3
        %s429 = scalar_select %p428, %s427, 3
        %p430 = scmp.lt.s32.totalorder %s19, 0
        %s431 = scalar_select %p430, %s19, 0
        %s432 = smul.addr %s429, 4
        %s433 = sadd.s32 %s431, %s432
        %s434 = smul.addr %s433, 8
        %s435 = scalar_lea.vmem %s3, %s434
        %s436 = smul.u32 2, %s18
        %v438 = vld [vmem:[%s377] sm:$0xff]
        %v439 = vld [vmem:[%s377 + $0x8] sm:$0xff]
        %v440 = vld [vmem:[%s377 + $0x10] sm:$0xff]
        %v441 = vld [vmem:[%s377 + $0x18] sm:$0xff]
        %v442 = vld [vmem:[%s377 + $0x20] sm:$0xff]
        %v443 = vld [vmem:[%s377 + $0x28] sm:$0xff]
        %v444 = vld [vmem:[%s377 + $0x30] sm:$0xff]
        %v445 = vld [vmem:[%s377 + $0x38] sm:$0xff]
        %v446 = vmul.f32 %v438, 0.17677669
        %v447 = vmul.f32 %v439, 0.17677669
        %v448 = vmul.f32 %v440, 0.17677669
        %v449 = vmul.f32 %v441, 0.17677669
        %v450 = vmul.f32 %v442, 0.17677669
        %v451 = vmul.f32 %v443, 0.17677669
        %v452 = vmul.f32 %v444, 0.17677669
        %v453 = vmul.f32 %v445, 0.17677669
        %v454 = vpack.c.bf16 %v447, %v446
        %v455 = vpack.c.bf16 %v449, %v448
        %v456 = vpack.c.bf16 %v451, %v450
        %v457 = vpack.c.bf16 %v453, %v452
        %v458 = vld [vmem:[%s384] sm:$0xff]
        %v459 = vld [vmem:[%s384 + $0x8] sm:$0xff]
        %v460 = vld [vmem:[%s384 + $0x10] sm:$0xff]
        %v461 = vld [vmem:[%s384 + $0x18] sm:$0xff]
        %v462 = vld [vmem:[%s384 + $0x20] sm:$0xff]
        %v463 = vld [vmem:[%s384 + $0x28] sm:$0xff]
        %v464 = vld [vmem:[%s384 + $0x30] sm:$0xff]
        %v465 = vld [vmem:[%s384 + $0x38] sm:$0xff]
        %v466 = vpack.c.bf16 %v459, %v458
        %v467 = vpack.c.bf16 %v461, %v460
        %v468 = vpack.c.bf16 %v463, %v462
        %v469 = vpack.c.bf16 %v465, %v464
        %v470 = vld [vmem:[%s391] sm:$0xff]
        %v471 = vld [vmem:[%s391 + $0x8] sm:$0xff]
        %v472 = vld [vmem:[%s391 + $0x10] sm:$0xff]
        %v473 = vld [vmem:[%s391 + $0x18] sm:$0xff]
        %v474 = vld [vmem:[%s391 + $0x20] sm:$0xff]
        %v475 = vld [vmem:[%s391 + $0x28] sm:$0xff]
        %v476 = vld [vmem:[%s391 + $0x30] sm:$0xff]
        %v477 = vld [vmem:[%s391 + $0x38] sm:$0xff]
        %v478 = vpack.c.bf16 %v471, %v470
        %v479 = vpack.c.bf16 %v473, %v472
        %v480 = vpack.c.bf16 %v475, %v474
        %v481 = vpack.c.bf16 %v477, %v476
        %482 = vxpose.xlu0.c.b16.start [1/8] %v466, 128
        %483 = vxpose.xlu0.c.b16.cont [2/8] %v467, 128
        %484 = vxpose.xlu0.c.b16.cont [3/8] 0, 128
        %485 = vxpose.xlu0.c.b16.cont [4/8] 0, 128
        %486 = vxpose.xlu0.c.b16.cont [5/8] 0, 128
        %487 = vxpose.xlu0.c.b16.cont [6/8] 0, 128
        %488 = vxpose.xlu0.c.b16.cont [7/8] 0, 128
        %489 = vxpose.xlu0.c.b16.end [8/8] 0, 128
        %v490 = vpop.trf.xlu0
        %v491 = vpop.trf.xlu0
        %v492 = vpop.trf.xlu0
        %v493 = vpop.trf.xlu0
        %v494 = vpop.trf.xlu0
        %v495 = vpop.trf.xlu0
        %v496 = vpop.trf.xlu0
        %v497 = vpop.trf.xlu0
        %vm498 = vcmask 261120
        %v500 = vsel %vm498, %v490, 0
        %502 = vmatprep.subr.bf16.mxu0 0
        %503 = vmatpush1.bf16.msra.mxu0 0
        %504 = vmatprep.subr.bf16.mxu0 0
        %505 = vmatpush1.bf16.msra.mxu0 0
        %506 = vmatprep.subr.bf16.mxu0 0
        %507 = vmatpush1.bf16.msra.mxu0 0
        %508 = vmatprep.subr.bf16.mxu0 0
        %509 = vmatpush1.bf16.msra.mxu0 0
        %510 = vmatprep.subr.bf16.mxu0 0
        %511 = vmatpush1.bf16.msra.mxu0 0
        %512 = vmatprep.subr.bf16.mxu0 0
        %513 = vmatpush1.bf16.msra.mxu0 0
        %514 = vmatprep.subr.bf16.mxu0 0
        %515 = vmatpush1.bf16.msra.mxu0 %v455
        %516 = vmatprep.subr.bf16.mxu0 0
        %517 = vmatpush1.bf16.msra.mxu0 %v454
        %518 = vmatprep.subr.bf16.mxu0 0
        %519 = vmatpush2.bf16.msra.mxu0 0
        %520 = vmatprep.subr.bf16.mxu0 0
        %521 = vmatpush2.bf16.msra.mxu0 0
        %522 = vmatprep.subr.bf16.mxu0 0
        %523 = vmatpush2.bf16.msra.mxu0 0
        %524 = vmatprep.subr.bf16.mxu0 0
        %525 = vmatpush2.bf16.msra.mxu0 0
        %526 = vmatprep.subr.bf16.mxu0 0
        %527 = vmatpush2.bf16.msra.mxu0 0
        %528 = vmatprep.subr.bf16.mxu0 0
        %529 = vmatpush2.bf16.msra.mxu0 0
        %530 = vmatprep.subr.bf16.mxu0 0
        %531 = vmatpush2.bf16.msra.mxu0 0
        %532 = vmatprep.subr.bf16.mxu0 0
        %533 = vmatpush2.bf16.msra.mxu0 0
        %534 = vmatprep.mubr.bf16.mxu0 0
        %535 = vmatmul.mubr.bf16.gmra.mxu0 %v500
        %v536 = vpop.f32.mrf.mxu0
        %v537 = vadd.f32 0.0, %v536
        %v538 = vpop.f32.mrf.mxu0
        %v539 = vpop.f32.mrf.mxu0
        %v540 = vadd.f32 0.0, %v539
        %v541 = vpop.f32.mrf.mxu0
        %542 = vdwg.mxu0
        %543 = vxpose.xlu0.c.b16.start [1/8] %v468, 128
        %544 = vxpose.xlu0.c.b16.cont [2/8] %v469, 128
        %545 = vxpose.xlu0.c.b16.cont [3/8] 0, 128
        %546 = vxpose.xlu0.c.b16.cont [4/8] 0, 128
        %547 = vxpose.xlu0.c.b16.cont [5/8] 0, 128
        %548 = vxpose.xlu0.c.b16.cont [6/8] 0, 128
        %549 = vxpose.xlu0.c.b16.cont [7/8] 0, 128
        %550 = vxpose.xlu0.c.b16.end [8/8] 0, 128
        %v551 = vpop.trf.xlu0
        %v552 = vpop.trf.xlu0
        %v553 = vpop.trf.xlu0
        %v554 = vpop.trf.xlu0
        %v555 = vpop.trf.xlu0
        %v556 = vpop.trf.xlu0
        %v557 = vpop.trf.xlu0
        %v558 = vpop.trf.xlu0
        %v560 = vsel %vm498, %v551, 0
        %562 = vmatprep.subr.bf16.mxu0 0
        %563 = vmatpush1.bf16.msra.mxu0 0
        %564 = vmatprep.subr.bf16.mxu0 0
        %565 = vmatpush1.bf16.msra.mxu0 0
        %566 = vmatprep.subr.bf16.mxu0 0
        %567 = vmatpush1.bf16.msra.mxu0 0
        %568 = vmatprep.subr.bf16.mxu0 0
        %569 = vmatpush1.bf16.msra.mxu0 0
        %570 = vmatprep.subr.bf16.mxu0 0
        %571 = vmatpush1.bf16.msra.mxu0 0
        %572 = vmatprep.subr.bf16.mxu0 0
        %573 = vmatpush1.bf16.msra.mxu0 0
        %574 = vmatprep.subr.bf16.mxu0 0
        %575 = vmatpush1.bf16.msra.mxu0 %v457
        %576 = vmatprep.subr.bf16.mxu0 0
        %577 = vmatpush1.bf16.msra.mxu0 %v456
        %578 = vmatprep.subr.bf16.mxu0 0
        %579 = vmatpush2.bf16.msra.mxu0 0
        %580 = vmatprep.subr.bf16.mxu0 0
        %581 = vmatpush2.bf16.msra.mxu0 0
        %582 = vmatprep.subr.bf16.mxu0 0
        %583 = vmatpush2.bf16.msra.mxu0 0
        %584 = vmatprep.subr.bf16.mxu0 0
        %585 = vmatpush2.bf16.msra.mxu0 0
        %586 = vmatprep.subr.bf16.mxu0 0
        %587 = vmatpush2.bf16.msra.mxu0 0
        %588 = vmatprep.subr.bf16.mxu0 0
        %589 = vmatpush2.bf16.msra.mxu0 0
        %590 = vmatprep.subr.bf16.mxu0 0
        %591 = vmatpush2.bf16.msra.mxu0 0
        %592 = vmatprep.subr.bf16.mxu0 0
        %593 = vmatpush2.bf16.msra.mxu0 0
        %594 = vmatprep.mubr.bf16.mxu0 0
        %595 = vmatmul.mubr.bf16.gmra.mxu0 %v560
        %v596 = vpop.f32.mrf.mxu0
        %v597 = vadd.f32 0.0, %v596
        %v598 = vpop.f32.mrf.mxu0
        %v599 = vpop.f32.mrf.mxu0
        %v600 = vadd.f32 0.0, %v599
        %v601 = vpop.f32.mrf.mxu0
        %602 = vdwg.mxu0
        %vm603 = vcmask 130048
        %v604 = vsel %vm603, %v537, -inf
        %v605 = vsel %vm603, %v540, -inf
        %v606 = vmax.f32 %v604, %v605
        %v607 = vrot.slane %v606, 4
        %v608 = vmax.f32 %v606, %v607
        %v609 = vrot.slane %v608, 2
        %v610 = vmax.f32 %v608, %v609
        %v611 = vrot.slane %v610, 1
        %v612 = vmax.f32 %v610, %v611
        %v613 = vsel %vm603, %v597, -inf
        %v614 = vsel %vm603, %v600, -inf
        %v615 = vmax.f32 %v613, %v614
        %v616 = vrot.slane %v615, 4
        %v617 = vmax.f32 %v615, %v616
        %v618 = vrot.slane %v617, 2
        %v619 = vmax.f32 %v617, %v618
        %v620 = vrot.slane %v619, 1
        %v621 = vmax.f32 %v619, %v620
        %v622 = vsub.f32 %v537, %v612
        %v623 = vsub.f32 %v540, %v612
        %v624 = vsub.f32 %v597, %v621
        %v625 = vsub.f32 %v600, %v621
        %v626 = vpack.c.bf16 %v623, %v622
        %v627 = vpack.c.bf16 %v625, %v624
        %v629 = vmul.bf16 %v626, 1069105081
        %v630 = vpow.bf16.pop %v629
        %v632 = vmul.bf16 %v627, 1069105081
        %v633 = vpow.bf16.pop %v632
        %v634 = vunpack.c.l.bf16 %v630
        %v635 = vunpack.c.h.bf16 %v630
        %v636 = vunpack.c.l.bf16 %v633
        %v637 = vunpack.c.h.bf16 %v633
        %v638 = vsel %vm603, %v634, 0.0
        %v639 = vsel %vm603, %v635, 0.0
        %v640 = vadd.f32 %v638, %v639
        %v641 = vrot.slane %v640, 4
        %v642 = vadd.f32 %v640, %v641
        %v643 = vrot.slane %v642, 2
        %v644 = vadd.f32 %v642, %v643
        %v645 = vrot.slane %v644, 1
        %v646 = vadd.f32 %v644, %v645
        %v647 = vsel %vm603, %v636, 0.0
        %v648 = vsel %vm603, %v637, 0.0
        %v649 = vadd.f32 %v647, %v648
        %v650 = vrot.slane %v649, 4
        %v651 = vadd.f32 %v649, %v650
        %v652 = vrot.slane %v651, 2
        %v653 = vadd.f32 %v651, %v652
        %v654 = vrot.slane %v653, 1
        %v655 = vadd.f32 %v653, %v654
        %v656 = vrcp.pop %v646
        %v657 = vrcp.pop %v655
        %v659 = vsel %vm603, %v478, 0
        %v662 = vsel %vm603, %v479, 0
        %664 = vmatprep.subr.bf16.mxu0 0
        %665 = vmatpush1.bf16.msra.mxu0 0
        %666 = vmatprep.subr.bf16.mxu0 0
        %667 = vmatpush1.bf16.msra.mxu0 0
        %668 = vmatprep.subr.bf16.mxu0 0
        %669 = vmatpush1.bf16.msra.mxu0 0
        %670 = vmatprep.subr.bf16.mxu0 0
        %671 = vmatpush1.bf16.msra.mxu0 0
        %672 = vmatprep.subr.bf16.mxu0 0
        %673 = vmatpush1.bf16.msra.mxu0 0
        %674 = vmatprep.subr.bf16.mxu0 0
        %675 = vmatpush1.bf16.msra.mxu0 0
        %676 = vmatprep.subr.bf16.mxu0 0
        %677 = vmatpush1.bf16.msra.mxu0 0
        %678 = vmatprep.subr.bf16.mxu0 0
        %679 = vmatpush1.bf16.msra.mxu0 %v630
        %680 = vmatprep.subr.bf16.mxu0 0
        %681 = vmatpush2.bf16.msra.mxu0 0
        %682 = vmatprep.subr.bf16.mxu0 0
        %683 = vmatpush2.bf16.msra.mxu0 0
        %684 = vmatprep.subr.bf16.mxu0 0
        %685 = vmatpush2.bf16.msra.mxu0 0
        %686 = vmatprep.subr.bf16.mxu0 0
        %687 = vmatpush2.bf16.msra.mxu0 0
        %688 = vmatprep.subr.bf16.mxu0 0
        %689 = vmatpush2.bf16.msra.mxu0 0
        %690 = vmatprep.subr.bf16.mxu0 0
        %691 = vmatpush2.bf16.msra.mxu0 0
        %692 = vmatprep.subr.bf16.mxu0 0
        %693 = vmatpush2.bf16.msra.mxu0 0
        %694 = vmatprep.subr.bf16.mxu0 0
        %695 = vmatpush2.bf16.msra.mxu0 0
        %696 = vmatprep.mubr.bf16.mxu0 0
        %697 = vmatmul.mubr.bf16.gmra.mxu0 %v659
        %v698 = vpop.f32.mrf.mxu0
        %v699 = vadd.f32 0.0, %v698
        %v700 = vpop.f32.mrf.mxu0
        %v701 = vpop.f32.mrf.mxu0
        %v702 = vadd.f32 0.0, %v701
        %v703 = vpop.f32.mrf.mxu0
        %704 = vmatprep.mubr.bf16.mxu0 0
        %705 = vmatmul.mubr.bf16.gmra.mxu0 %v662
        %v706 = vpop.f32.mrf.mxu0
        %v707 = vadd.f32 0.0, %v706
        %v708 = vpop.f32.mrf.mxu0
        %v709 = vpop.f32.mrf.mxu0
        %v710 = vadd.f32 0.0, %v709
        %v711 = vpop.f32.mrf.mxu0
        %712 = vdwg.mxu0
        %v714 = vsel %vm603, %v480, 0
        %v717 = vsel %vm603, %v481, 0
        %719 = vmatprep.subr.bf16.mxu0 0
        %720 = vmatpush1.bf16.msra.mxu0 0
        %721 = vmatprep.subr.bf16.mxu0 0
        %722 = vmatpush1.bf16.msra.mxu0 0
        %723 = vmatprep.subr.bf16.mxu0 0
        %724 = vmatpush1.bf16.msra.mxu0 0
        %725 = vmatprep.subr.bf16.mxu0 0
        %726 = vmatpush1.bf16.msra.mxu0 0
        %727 = vmatprep.subr.bf16.mxu0 0
        %728 = vmatpush1.bf16.msra.mxu0 0
        %729 = vmatprep.subr.bf16.mxu0 0
        %730 = vmatpush1.bf16.msra.mxu0 0
        %731 = vmatprep.subr.bf16.mxu0 0
        %732 = vmatpush1.bf16.msra.mxu0 0
        %733 = vmatprep.subr.bf16.mxu0 0
        %734 = vmatpush1.bf16.msra.mxu0 %v633
        %735 = vmatprep.subr.bf16.mxu0 0
        %736 = vmatpush2.bf16.msra.mxu0 0
        %737 = vmatprep.subr.bf16.mxu0 0
        %738 = vmatpush2.bf16.msra.mxu0 0
        %739 = vmatprep.subr.bf16.mxu0 0
        %740 = vmatpush2.bf16.msra.mxu0 0
        %741 = vmatprep.subr.bf16.mxu0 0
        %742 = vmatpush2.bf16.msra.mxu0 0
        %743 = vmatprep.subr.bf16.mxu0 0
        %744 = vmatpush2.bf16.msra.mxu0 0
        %745 = vmatprep.subr.bf16.mxu0 0
        %746 = vmatpush2.bf16.msra.mxu0 0
        %747 = vmatprep.subr.bf16.mxu0 0
        %748 = vmatpush2.bf16.msra.mxu0 0
        %749 = vmatprep.subr.bf16.mxu0 0
        %750 = vmatpush2.bf16.msra.mxu0 0
        %751 = vmatprep.mubr.bf16.mxu0 0
        %752 = vmatmul.mubr.bf16.gmra.mxu0 %v714
        %v753 = vpop.f32.mrf.mxu0
        %v754 = vadd.f32 0.0, %v753
        %v755 = vpop.f32.mrf.mxu0
        %v756 = vpop.f32.mrf.mxu0
        %v757 = vadd.f32 0.0, %v756
        %v758 = vpop.f32.mrf.mxu0
        %759 = vmatprep.mubr.bf16.mxu0 0
        %760 = vmatmul.mubr.bf16.gmra.mxu0 %v717
        %v761 = vpop.f32.mrf.mxu0
        %v762 = vadd.f32 0.0, %v761
        %v763 = vpop.f32.mrf.mxu0
        %v764 = vpop.f32.mrf.mxu0
        %v765 = vadd.f32 0.0, %v764
        %v766 = vpop.f32.mrf.mxu0
        %767 = vdwg.mxu0
        %v768 = vmul.f32 %v699, %v656
        %v769 = vmul.f32 %v702, %v656
        %v770 = vmul.f32 %v707, %v656
        %v771 = vmul.f32 %v710, %v656
        %v772 = vmul.f32 %v754, %v657
        %v773 = vmul.f32 %v757, %v657
        %v774 = vmul.f32 %v762, %v657
        %v775 = vmul.f32 %v765, %v657
        %776 = vst.msk [vmem:[%s435] sm:$0xff] %vm603, %v768
        %777 = vst.msk [vmem:[%s435 + $0x8] sm:$0xff] %vm603, %v769
        %778 = vst.msk [vmem:[%s435 + $0x10] sm:$0xff] %vm603, %v770
        %779 = vst.msk [vmem:[%s435 + $0x18] sm:$0xff] %vm603, %v771
        %780 = vst.msk [vmem:[%s435 + $0x20] sm:$0xff] %vm603, %v772
        %781 = vst.msk [vmem:[%s435 + $0x28] sm:$0xff] %vm603, %v773
        %782 = vst.msk [vmem:[%s435 + $0x30] sm:$0xff] %vm603, %v774
        %783 = vst.msk [vmem:[%s435 + $0x38] sm:$0xff] %vm603, %v775
        %s784 = smul.u32 2, %s18
        %p785 = scmp.lt.s32.totalorder %s784, 3
        %s786 = scalar_select %p785, %s784, 3
        %p787 = scmp.lt.s32.totalorder %s19, 0
        %s788 = scalar_select %p787, %s19, 0
        %s789 = smul.addr %s786, 4
        %s790 = sadd.s32 %s788, %s789
        %s791 = smul.addr %s790, 8
        %s792 = scalar_lea.vmem %s3, %s791
        // Predicated region
        $region147: #{tpu_custom_call.1} parent=133 // pred_check
          %p793 = pneg %p126
        $region148: #{tpu_custom_call.1} parent=133 // pred_check_branch
          %795 = sbr.rel (%p793) target = $region150
        $region149: #{tpu_custom_call.1} parent=133 // pred_region
          %s796 = smul.u32 2, %s18
        $region150: #{tpu_custom_call.1} parent=133 // pred_fallthru
          _
      $region134: #{tpu_custom_call.1} parent=5 // pred_fallthru
        _
      %p797 = scmp.le.s32.totalorder 2, %s9
      // Predicated region
      $region151: #{tpu_custom_call.1} parent=5 // pred_check
        %p798 = pneg %p797
      $region152: #{tpu_custom_call.1} parent=5 // pred_check_branch
        %800 = sbr.rel (%p798) target = $region154
      $region153: #{tpu_custom_call.1} parent=5 // pred_region
        %s801 = ssub.s32 %s9, 2
        // Predicated region
        $region155: #{tpu_custom_call.1} parent=153 // pred_check
          %p802 = pneg %p132
        $region156: #{tpu_custom_call.1} parent=153 // pred_check_branch
          %804 = sbr.rel (%p802) target = $region158
        $region157: #{tpu_custom_call.1} parent=153 // pred_region
          %s805 = smul.u32 2, %s20
          %p806 = scmp.lt.s32.totalorder %s805, 3
          %s807 = scalar_select %p806, %s805, 3
          %p808 = scmp.lt.s32.totalorder %s21, 0
          %s809 = scalar_select %p808, %s21, 0
          %s810 = smul.addr %s807, 4
          %s811 = sadd.s32 %s809, %s810
          %s812 = smul.addr %s811, 8
          %s813 = scalar_lea.vmem %s3, %s812
        $region158: #{tpu_custom_call.1} parent=153 // pred_fallthru
          _
      $region154: #{tpu_custom_call.1} parent=5 // pred_fallthru
        _
    $region6: #{tpu_custom_call.1} parent=1 // loop_footer
      %s13 = sadd.s32 1, %s9
    $region7: #{tpu_custom_call.1} parent=1 // loop_footer_branch
      %8 = sbr.rel target = $region3
    $region8: #{tpu_custom_call.1} parent=1 // loop_exit
      _

</llo_original>
